<compile_context>
chip_gen: v5e
topology: v5e:2x2
jax: 0.10.0
libtpu: 0.0.40
codegen_flags: <defaults>
</compile_context>

<pallas_src>
import numpy as np

import jax
import jax.numpy as jnp
from jax.experimental import pallas as pl
from jax.experimental.pallas import tpu as pltpu


# ---------------------------------------------------------------------------
# Upsampling matrices (PyTorch bilinear, scale=2, align_corners=False).
# ---------------------------------------------------------------------------
def _bilinear_up2_matrix(n_in):
    """(2*n_in, n_in) matrix M such that M @ v is the 2x bilinear upsample."""
    o = np.arange(2 * n_in)
    src = np.maximum((o + 0.5) / 2.0 - 0.5, 0.0)
    i0 = np.minimum(np.floor(src).astype(np.int64), n_in - 1)
    i1 = np.minimum(i0 + 1, n_in - 1)
    frac = src - i0
    m = np.zeros((2 * n_in, n_in), dtype=np.float32)
    m[o, i0] += 1.0 - frac          # (o, i0) pairs are unique per statement
    m[o, i1] += frac
    return m


# ---------------------------------------------------------------------------
# Kernels.  One grid step handles a (1, tc, H, W) input block and writes the
# matching (1, tc, 2H, 2W) output block; channels are processed one at a time
# to keep the live f32 temporaries small.
# ---------------------------------------------------------------------------
def _bilinear2x_kernel(x_ref, uw_ref, o_ref):
    """Fast path (H % 8 == 0): VPU vertical pass + MXU horizontal pass."""
    _, tc, H, W = x_ref.shape
    uw = uw_ref[...]                                   # (W, 2W), resident

    @pl.loop(0, tc)
    def _(c):
        x = x_ref[0, c].astype(jnp.float32)            # (H, W), f32 accumulation
        # Vertical pass: edge-clamped +/-1 row neighbours.  Kept as slice +
        # concat (shift-direction unambiguous, proven lowering); the footprint
        # concern from the review is addressed by the per-channel loop.
        up = jnp.concatenate([x[:1], x[:-1]], axis=0)  # x[k-1], top-clamped
        dn = jnp.concatenate([x[1:], x[-1:]], axis=0)  # x[k+1], bottom-clamped
        h_even = 0.25 * up + 0.75 * x                  # output rows 2k
        h_odd = 0.75 * x + 0.25 * dn                   # output rows 2k+1
        # Row interleave: (H, 2, W) -> (2H, W).  Lane dim untouched (sublane
        # granularity only).
        rows = jnp.stack([h_even, h_odd], axis=1).reshape(2 * H, W)
        # Horizontal pass on the (idle) MXU via the banded (W, 2W) matrix.
        # Output is naturally lane-dense; no transposes / lane interleaves.
        out = jnp.dot(rows.astype(uw.dtype), uw,
                      preferred_element_type=jnp.float32)        # (2H, 2W)
        o_ref[0, c] = out.astype(o_ref.dtype)


def _bilinear2x_mxu_kernel(x_ref, uh_ref, uw_ref, o_ref):
    """General path (any H, W): both passes as MXU matmuls.  Robust for odd /
    unaligned spatial sizes where sublane-interleave reshapes are risky."""
    _, tc, _, _ = x_ref.shape
    uh = uh_ref[...]                                   # (2H, H), resident
    uw = uw_ref[...]                                   # (W, 2W), resident

    @pl.loop(0, tc)
    def _(c):
        x = x_ref[0, c].astype(uh.dtype)
        rows = jnp.dot(uh, x, preferred_element_type=jnp.float32)        # (2H, W)
        out = jnp.dot(rows.astype(uw.dtype), uw,
                      preferred_element_type=jnp.float32)                # (2H, 2W)
        o_ref[0, c] = out.astype(o_ref.dtype)


# ---------------------------------------------------------------------------
# Tiling / VMEM budgeting.
# ---------------------------------------------------------------------------
_DEFAULT_VMEM_LIMIT = 32 * 1024 * 1024


def _vmem_limit_bytes():
    """Scoped-VMEM limit per generation: ~3/4 of physical, capped at 64 MiB
    (-> ~48 MiB on v7x's 64 MiB/TC, 64 MiB on v5e/v6e's 128 MiB)."""
    try:
        cap = int(pltpu.get_tpu_info().vmem_capacity_bytes)
        return int(min(cap * 3 // 4, 64 * 1024 * 1024))
    except Exception:                                   # pragma: no cover
        return _DEFAULT_VMEM_LIMIT


def _choose_tc(C, H, W, itemsize, vmem_limit):
    """Channels per block.

    Pipeline buffers per step (double-buffered in + out):
        2 * (tc*H*W*itemsize + tc*2H*2W*itemsize) = 10 * tc * H * W * itemsize
    Keep those under ~55% of the scoped limit; the remainder covers the
    resident Uh/Uw constants and the per-channel f32 temporaries of the body
    (~10 * H * W * 4 bytes, independent of tc thanks to the channel loop).
    """
    budget = (vmem_limit * 55) // 100
    per_c = 10 * H * W * itemsize
    tc = max(1, min(C, budget // max(1, per_c)))
    # Keep >= 4 channel blocks when C allows it so a v7x chip (2 TensorCores)
    # gets >= 2 pipelined steps per core even at N == 1.
    if C >= 4:
        tc = min(tc, C // 4)
    elif C >= 2:
        tc = min(tc, C // 2)
    tc = max(tc, 1)
    while C % tc:                                       # grid must tile C exactly
        tc -= 1
    return tc


# ---------------------------------------------------------------------------
# Public wrapper.
# ---------------------------------------------------------------------------
def interpolate_2x_bilinear(x):
    """Pallas TPU equivalent of
    F.interpolate(x, scale_factor=2, mode='bilinear', align_corners=False)
    for NCHW input."""
    N, C, H, W = x.shape
    vmem_limit = _vmem_limit_bytes()
    tc = _choose_tc(C, H, W, x.dtype.itemsize, vmem_limit)

    # MXU operand dtype: bf16 activations use bf16 matmul operands (weights are
    # exactly representable; accumulation stays f32); everything else uses f32.
    mm_dtype = jnp.bfloat16 if x.dtype == jnp.bfloat16 else jnp.float32
    uw = jnp.asarray(_bilinear_up2_matrix(W).T, dtype=mm_dtype)      # (W, 2W)

    x_spec = pl.BlockSpec((1, tc, H, W), lambda n, c: (n, c, 0, 0))
    uw_spec = pl.BlockSpec((W, 2 * W), lambda n, c: (0, 0))          # resident
    out_spec = pl.BlockSpec((1, tc, 2 * H, 2 * W), lambda n, c: (n, c, 0, 0))

    if H % 8 == 0:
        kernel = _bilinear2x_kernel
        in_specs = [x_spec, uw_spec]
        args = (x, uw)
    else:
        uh = jnp.asarray(_bilinear_up2_matrix(H), dtype=mm_dtype)    # (2H, H)
        kernel = _bilinear2x_mxu_kernel
        in_specs = [x_spec,
                    pl.BlockSpec((2 * H, H), lambda n, c: (0, 0)),
                    uw_spec]
        args = (x, uh, uw)

    cost = pl.CostEstimate(
        flops=int(N * C * H * W * (6 + 8 * W)),
        transcendentals=0,
        bytes_accessed=int(5 * N * C * H * W * x.dtype.itemsize),
    )

    return pl.pallas_call(
        kernel,
        out_shape=jax.ShapeDtypeStruct((N, C, 2 * H, 2 * W), x.dtype),
        grid=(N, C // tc),
        in_specs=in_specs,
        out_specs=out_spec,
        compiler_params=pltpu.CompilerParams(
            dimension_semantics=("parallel", "parallel"),
            vmem_limit_bytes=vmem_limit,
        ),
        cost_estimate=cost,
    )(*args)


# ---------------------------------------------------------------------------
# Pure-JAX reference (PyTorch bilinear, scale=2, align_corners=False).
# ---------------------------------------------------------------------------
def _ref_bilinear2x(x):
    N, C, H, W = x.shape

    def coords(out_size, in_size):
        o = jnp.arange(out_size, dtype=jnp.float32)
        src = jnp.maximum((o + 0.5) / 2.0 - 0.5, 0.0)
        i0 = jnp.minimum(jnp.floor(src).astype(jnp.int32), in_size - 1)
        i1 = jnp.minimum(i0 + 1, in_size - 1)
        frac = src - i0.astype(jnp.float32)
        return i0, i1, frac

    hi0, hi1, hf = coords(2 * H, H)
    wi0, wi1, wf = coords(2 * W, W)
    xh = (x[:, :, hi0, :] * (1.0 - hf)[None, None, :, None]
          + x[:, :, hi1, :] * hf[None, None, :, None])
    return xh[:, :, :, wi0] * (1.0 - wf) + xh[:, :, :, wi1] * wf


if __name__ == "__main__":
    # Tolerances are loose enough to cover a reduced-precision MXU matmul pass;
    # structural errors (wrong weights / interleave / edge clamp) are >> 0.05.
    key = jax.random.PRNGKey(0)

    # Primary case: NCHW f32, H % 8 == 0 fast path.
    x = jax.random.normal(key, (2, 4, 16, 16), dtype=jnp.float32)
    y = jax.block_until_ready(interpolate_2x_bilinear(x))
    assert y.shape == (2, 4, 32, 32), y.shape
    y_ref = _ref_bilinear2x(x)
    assert jnp.allclose(y, y_ref, atol=5e-2, rtol=5e-2), (
        float(jnp.max(jnp.abs(y - y_ref))))

    # bf16 activations (common on v6e/v7x): f32 accumulation, bf16 MXU + store.
    xb = x.astype(jnp.bfloat16)
    yb = jax.block_until_ready(interpolate_2x_bilinear(xb))
    assert yb.dtype == jnp.bfloat16 and yb.shape == (2, 4, 32, 32)
    yb_ref = _ref_bilinear2x(xb.astype(jnp.float32))
    assert jnp.allclose(yb.astype(jnp.float32), yb_ref, atol=8e-2, rtol=5e-2), (
        float(jnp.max(jnp.abs(yb.astype(jnp.float32) - yb_ref))))

    # Non-square, non-multiple-of-8 spatial dims exercise the all-MXU path.
    x2 = jax.random.normal(jax.random.PRNGKey(1), (1, 3, 10, 20),
                           dtype=jnp.float32)
    y2 = jax.block_until_ready(interpolate_2x_bilinear(x2))
    assert y2.shape == (1, 3, 20, 40), y2.shape
    y2_ref = _ref_bilinear2x(x2)
    assert jnp.allclose(y2, y2_ref, atol=5e-2, rtol=5e-2), (
        float(jnp.max(jnp.abs(y2 - y2_ref))))

    print("KERNEL_OK")
</pallas_src>

<mosaic_0001>
module attributes {stable_mosaic.version = 11 : i64} {
  func.func @_bilinear2x_kernel(%arg0: i32, %arg1: i32, %arg2: memref<1x1x16x16xf32, #tpu.memory_space<vmem>>, %arg3: memref<16x32xf32, #tpu.memory_space<vmem>>, %arg4: memref<1x1x32x32xf32, #tpu.memory_space<vmem>>) attributes {dimension_semantics = [#tpu.dimension_semantics<parallel>, #tpu.dimension_semantics<parallel>], iteration_bounds = array<i64: 2, 4>, scalar_prefetch = 0 : i64, scratch_operands = 0 : i64, tpu.core_type = #tpu.core_type<tc>, window_params = [{transform_indices = @transform_0, window_bounds = array<i64: 1, 1, 16, 16>}, {pipeline_mode = #tpu.pipeline_mode<synchronous>, transform_indices = @transform_1, window_bounds = array<i64: 16, 32>}, {transform_indices = @transform_2, window_bounds = array<i64: 1, 1, 32, 32>}]} {
    %c0 = arith.constant 0 : index
    %c0_0 = arith.constant 0 : index
    %0 = vector.load %arg3[%c0, %c0_0] : memref<16x32xf32, #tpu.memory_space<vmem>>, vector<16x32xf32>
    %c0_i32 = arith.constant 0 : i32
    %c1_i32 = arith.constant 1 : i32
    %1 = arith.muli %c0_i32, %c1_i32 : i32
    %c0_i32_1 = arith.constant 0 : i32
    %2 = arith.addi %c0_i32_1, %1 : i32
    %c0_2 = arith.constant 0 : index
    %3 = arith.index_cast %2 : i32 to index
    %c0_3 = arith.constant 0 : index
    %c0_4 = arith.constant 0 : index
    %4 = vector.load %arg2[%c0_2, %3, %c0_3, %c0_4] : memref<1x1x16x16xf32, #tpu.memory_space<vmem>>, vector<1x1x16x16xf32>
    %5 = vector.shape_cast %4 : vector<1x1x16x16xf32> to vector<16x16xf32>
    %6 = vector.extract_strided_slice %5 {offsets = [0, 0], sizes = [1, 16], strides = [1, 1]} : vector<16x16xf32> to vector<1x16xf32>
    %7 = vector.extract_strided_slice %5 {offsets = [0, 0], sizes = [15, 16], strides = [1, 1]} : vector<16x16xf32> to vector<15x16xf32>
    %8 = tpu.concatenate %6, %7 in 0 : vector<1x16xf32>, vector<15x16xf32> -> vector<16x16xf32>
    %9 = vector.extract_strided_slice %5 {offsets = [1, 0], sizes = [15, 16], strides = [1, 1]} : vector<16x16xf32> to vector<15x16xf32>
    %10 = vector.extract_strided_slice %5 {offsets = [15, 0], sizes = [1, 16], strides = [1, 1]} : vector<16x16xf32> to vector<1x16xf32>
    %11 = tpu.concatenate %9, %10 in 0 : vector<15x16xf32>, vector<1x16xf32> -> vector<16x16xf32>
    %cst = arith.constant 2.500000e-01 : f32
    %12 = vector.broadcast %cst : f32 to vector<16x16xf32>
    %13 = arith.mulf %12, %8 : vector<16x16xf32>
    %cst_5 = arith.constant 7.500000e-01 : f32
    %14 = vector.broadcast %cst_5 : f32 to vector<16x16xf32>
    %15 = arith.mulf %14, %5 : vector<16x16xf32>
    %16 = arith.addf %13, %15 : vector<16x16xf32>
    %cst_6 = arith.constant 7.500000e-01 : f32
    %17 = vector.broadcast %cst_6 : f32 to vector<16x16xf32>
    %18 = arith.mulf %17, %5 : vector<16x16xf32>
    %cst_7 = arith.constant 2.500000e-01 : f32
    %19 = vector.broadcast %cst_7 : f32 to vector<16x16xf32>
    %20 = arith.mulf %19, %11 : vector<16x16xf32>
    %21 = arith.addf %18, %20 : vector<16x16xf32>
    %22 = vector.shape_cast %16 : vector<16x16xf32> to vector<16x1x16xf32>
    %23 = vector.shape_cast %21 : vector<16x16xf32> to vector<16x1x16xf32>
    %24 = tpu.concatenate %22, %23 in 1 : vector<16x1x16xf32>, vector<16x1x16xf32> -> vector<16x2x16xf32>
    %25 = vector.shape_cast %24 : vector<16x2x16xf32> to vector<32x16xf32>
    %cst_8 = arith.constant dense<0.000000e+00> : vector<32x32xf32>
    %26 = tpu.matmul %25, %0, %cst_8 {dimension_numbers = #tpu.dot_dimension_numbers<[1], [0], [0], [1], [0, 0, 1, 1], [], []>} : vector<32x16xf32>, vector<16x32xf32>, vector<32x32xf32> -> vector<32x32xf32>
    %c0_9 = arith.constant 0 : index
    %27 = arith.index_cast %2 : i32 to index
    %c0_10 = arith.constant 0 : index
    %c0_11 = arith.constant 0 : index
    %28 = vector.load %arg4[%c0_9, %27, %c0_10, %c0_11] : memref<1x1x32x32xf32, #tpu.memory_space<vmem>>, vector<1x1x32x32xf32>
    %29 = vector.shape_cast %28 : vector<1x1x32x32xf32> to vector<32x32xf32>
    %30 = vector.shape_cast %26 : vector<32x32xf32> to vector<1x1x32x32xf32>
    tpu.vector_store %arg4[%c0_9, %27, %c0_10, %c0_11], %30 {strides = array<i32>} : memref<1x1x32x32xf32, #tpu.memory_space<vmem>>, vector<1x1x32x32xf32>,
    %c1_i32_12 = arith.constant 1 : i32
    return
  }
  func.func @transform_0(%arg0: i32, %arg1: i32) -> (i32, i32, i32, i32) {
    %c0_i32 = arith.constant 0 : i32
    %c0_i32_0 = arith.constant 0 : i32
    %c0_i32_1 = arith.constant 0 : i32
    return %arg0, %arg1, %c0_i32, %c0_i32_0 : i32, i32, i32, i32
  }
  func.func @transform_1(%arg0: i32, %arg1: i32) -> (i32, i32) {
    %c0_i32 = arith.constant 0 : i32
    %c0_i32_0 = arith.constant 0 : i32
    %c0_i32_1 = arith.constant 0 : i32
    return %c0_i32, %c0_i32_0 : i32, i32
  }
  func.func @transform_2(%arg0: i32, %arg1: i32) -> (i32, i32, i32, i32) {
    %c0_i32 = arith.constant 0 : i32
    %c0_i32_0 = arith.constant 0 : i32
    %c0_i32_1 = arith.constant 0 : i32
    return %arg0, %arg1, %c0_i32, %c0_i32_0 : i32, i32, i32, i32
  }
}

</mosaic_0001>

<llo_original>
// kernel: tpu_custom_call.1
$region0: #{tpu_custom_call.1}
  #allocation0 [shape = 'u32[]', space=smem, size = 0x4, offset = 0x4, fixed_abs, tag = 'smem constant byte address 0x4 - core index']
  #allocation1 [shape = 'u32[72,128]{1,0:T(1,128)}', space=vmem, size = 0x9000, scoped, tag = 'internal scratch']
  %s0 = inlined_call_operand.hbm [shape: f32[2,4,16,16], index: 0, kind: input, shape index: {}]
  %s1 = inlined_call_operand.hbm [shape: f32[16,32], index: 1, kind: input, shape index: {}]
  %s2 = inlined_call_operand.hbm [shape: f32[2,4,32,32], index: 2, kind: output, shape index: {}]
  %s3 = sld [smem:[#allocation0]]
  $region49: #{tpu_custom_call.1} parent=0
    _
  %s5 = ssub.s32 1, %s3
  %s6 = scalar_select 0, %s5, %s3
  $region1: #{tpu_custom_call.1} parent=0
    #allocation2 [shape = 'u8[16384]{0}', space=vmem, size = 0x4000, scoped, tag = 'input window, operand 0']
    #allocation3 [shape = 's32[2]{0}', space=sflag, size = 0x8, scoped, tag = 'scoped memory for tpu_custom_call.1']
    #allocation4 [shape = 's32[2]{0}', space=sflag, size = 0x8, scoped, tag = 'scoped memory for tpu_custom_call.1']
    #allocation5 [shape = 'u8[8192]{0}', space=vmem, size = 0x2000, scoped, tag = 'input window, operand 1, single buffered']
    #allocation6 [shape = 's32[1]{0}', space=sflag, size = 0x4, scoped, tag = 'scoped memory for tpu_custom_call.1']
    #allocation7 [shape = 'u8[32768]{0}', space=vmem, size = 0x8000, scoped, tag = 'output window, operand 0']
    %7 = vsyncpa [#allocation3], 0
    %s8 = scalar_lea.sflag [#allocation3], 1
    %9 = vsyncpa %s8, 0
    %10 = vsyncpa [#allocation6], 0
    %11 = vsyncpa [#allocation4], 0
    %s12 = scalar_lea.sflag [#allocation4], 1
    %13 = vsyncpa %s12, 0
    loop: start=0, step=1, limit=10
    $region2: #{tpu_custom_call.1} parent=1 // loop_pre_header
      _
    $region3: #{tpu_custom_call.1} parent=1 // loop_header
      %s15 = sphi 0, %s19
      %p16 = scmp.ge.s32.totalorder %s15, 10
      %s22 = sphi 0, %s34
      %s23 = sphi 0, %s30
      %s24 = sphi 0, %s22
      %s25 = sphi 0, %s23
      %s26 = sphi 0, %s24
      %s27 = sphi 0, %s25
      %s39 = sphi 0, %s41
      %s42 = sphi 0, %s39
      %s43 = sphi 0, %s42
      %s59 = sphi 0, %s43
      %s63 = sphi 0, %s63
      %s65 = sphi 0, %s63
      %s66 = sphi 0, %s65
      %s80 = sphi 0, %s66
      %s88 = sphi 0, %s90
      %s91 = sphi 0, %s88
      %s92 = sphi 0, %s91
      %s108 = sphi 0, %s92
    $region4: #{tpu_custom_call.1} parent=1 // loop_header_branch
      %18 = sbr.rel (%p16) target = $region8
    $region5: #{tpu_custom_call.1} parent=1 // loop_body
      %s20 = ssub.s32 %s15, 1
      %s21 = ssub.s32 %s15, 2
      %s28 = sadd.s32 1, %s23
      %p29 = scmp.ge.s32.totalorder %s28, 4
      %s30 = scalar_select %p29, 0, %s28
      %s31 = sadd.s32 1, %s22
      %s32 = scalar_select %p29, %s31, %s22
      %p33 = scmp.ge.s32.totalorder %s32, 2
      %s34 = scalar_select %p33, 0, %s32
      %s35 = ssub.s32 %s22, %s34
      %s36 = ssub.s32 %s23, %s30
      %s37 = sor.u32 %s35, %s36
      %p38 = scmp.eq.s32.totalorder %s37, 0
      %s40 = sadd.s32 %s39, 1
      %s41 = scalar_select %p38, %s39, %s40
      %p44 = pneg %p38
      %p45 = scmp.eq.s32.totalorder %s15, 7
      %p46 = por %p44, %p45
      %p47 = scmp.ne.s32.totalorder %s39, %s42
      %p48 = scmp.eq.s32.totalorder %s15, 0
      %p49 = por %p47, %p48
      %p50 = scmp.ne.s32.totalorder %s39, %s42
      %p51 = scmp.eq.s32.totalorder %s20, 7
      %p52 = por %p50, %p51
      %p53 = scmp.ne.s32.totalorder %s42, %s43
      %p54 = scmp.eq.s32.totalorder %s20, 0
      %p55 = por %p53, %p54
      %p56 = scmp.ne.s32.totalorder %s42, %s43
      %p57 = scmp.eq.s32.totalorder %s21, 7
      %p58 = por %p56, %p57
      %p60 = scmp.ne.s32.totalorder %s43, %s59
      %p61 = scmp.eq.s32.totalorder %s21, 0
      %p62 = por %p60, %p61
      %s64 = sadd.s32 %s63, 1
      %p67 = scmp.eq.s32.totalorder %s15, 7
      %p68 = scmp.ne.s32.totalorder %s63, %s65
      %p69 = scmp.eq.s32.totalorder %s15, 0
      %p70 = por %p68, %p69
      %p71 = scmp.ne.s32.totalorder %s63, %s65
      %p72 = scmp.eq.s32.totalorder %s20, 7
      %p73 = por %p71, %p72
      %p74 = scmp.ne.s32.totalorder %s65, %s66
      %p75 = scmp.eq.s32.totalorder %s20, 0
      %p76 = por %p74, %p75
      %p77 = scmp.ne.s32.totalorder %s65, %s66
      %p78 = scmp.eq.s32.totalorder %s21, 7
      %p79 = por %p77, %p78
      %p81 = scmp.ne.s32.totalorder %s66, %s80
      %p82 = scmp.eq.s32.totalorder %s21, 0
      %p83 = por %p81, %p82
      %s84 = ssub.s32 %s22, %s34
      %s85 = ssub.s32 %s23, %s30
      %s86 = sor.u32 %s84, %s85
      %p87 = scmp.eq.s32.totalorder %s86, 0
      %s89 = sadd.s32 %s88, 1
      %s90 = scalar_select %p87, %s88, %s89
      %p93 = pneg %p87
      %p94 = scmp.eq.s32.totalorder %s15, 7
      %p95 = por %p93, %p94
      %p96 = scmp.ne.s32.totalorder %s88, %s91
      %p97 = scmp.eq.s32.totalorder %s15, 0
      %p98 = por %p96, %p97
      %p99 = scmp.ne.s32.totalorder %s88, %s91
      %p100 = scmp.eq.s32.totalorder %s20, 7
      %p101 = por %p99, %p100
      %p102 = scmp.ne.s32.totalorder %s91, %s92
      %p103 = scmp.eq.s32.totalorder %s20, 0
      %p104 = por %p102, %p103
      %p105 = scmp.ne.s32.totalorder %s91, %s92
      %p106 = scmp.eq.s32.totalorder %s21, 7
      %p107 = por %p105, %p106
      %p109 = scmp.ne.s32.totalorder %s92, %s108
      %p110 = scmp.eq.s32.totalorder %s21, 0
      %p111 = por %p109, %p110
      %p112 = scmp.le.s32.totalorder 1, %s15
      %p113 = scmp.lt.s32.totalorder %s15, 9
      %p114 = pnand %p112, %p113
      %p115 = pneg %p114
      // Predicated region
      $region9: #{tpu_custom_call.1} parent=5 // pred_check
        _
      $region10: #{tpu_custom_call.1} parent=5 // pred_check_branch
        %117 = sbr.rel (%p114) target = $region12
      $region11: #{tpu_custom_call.1} parent=5 // pred_region
        %s118 = ssub.s32 %s15, 1
        // Predicated region
        $region13: #{tpu_custom_call.1} parent=11 // pred_check
          %p119 = pneg %p76
        $region14: #{tpu_custom_call.1} parent=11 // pred_check_branch
          %121 = sbr.rel (%p119) target = $region16
        $region15: #{tpu_custom_call.1} parent=11 // pred_region
          %123 = vsyncadd [#allocation6], 0
          %s124 = sshll.u32 %s1, 4
          %s125 = int_to_ptr.hbm [resolvable:$true] %s124
          %s126 = sshll.u32 [#allocation5], 4
          %s127 = int_to_ptr.vmem [resolvable:$true] %s126
          %132 = dma.hbm_to_vmem [thread:$0]  %s125, 256, %s127, [#allocation6], 128, 128, 8
        $region16: #{tpu_custom_call.1} parent=11 // pred_fallthru
          _
      $region12: #{tpu_custom_call.1} parent=5 // pred_fallthru
        _
      %p133 = scmp.lt.s32.totalorder %s15, 8
      // Predicated region
      $region17: #{tpu_custom_call.1} parent=5 // pred_check
        %p134 = pneg %p133
      $region18: #{tpu_custom_call.1} parent=5 // pred_check_branch
        %136 = sbr.rel (%p134) target = $region20
      $region19: #{tpu_custom_call.1} parent=5 // pred_region
        // Predicated region
        $region21: #{tpu_custom_call.1} parent=19 // pred_check
          %p137 = pneg %p49
        $region22: #{tpu_custom_call.1} parent=19 // pred_check_branch
          %139 = sbr.rel (%p137) target = $region24
        $region23: #{tpu_custom_call.1} parent=19 // pred_region
          %s140 = sand.u32 %s39, 1
          %s141 = scalar_lea.sflag [#allocation3], %s140
          %s142 = sand.u32 %s39, 1
          %s143 = smul.addr %s142, 16
          %s144 = scalar_lea.vmem [#allocation2], %s143
          %146 = vsyncadd %s141, 0
          %s147 = smul.addr %s23, 2
          %s148 = smul.addr %s22, 8
          %s149 = sadd.s32 %s147, %s148
          %s150 = smul.addr %s149, 8
          %s151 = scalar_lea.hbm %s0, %s150
          %s152 = sshll.u32 %s151, 4
          %s153 = int_to_ptr.hbm [resolvable:$true] %s152
          %s154 = sshll.u32 %s144, 4
          %s155 = int_to_ptr.vmem [resolvable:$true] %s154
          %160 = dma.hbm_to_vmem [thread:$0]  %s153, 256, %s155, %s141, 128, 128, 8
        $region24: #{tpu_custom_call.1} parent=19 // pred_fallthru
          _
      $region20: #{tpu_custom_call.1} parent=5 // pred_fallthru
        _
      %p161 = scmp.le.s32.totalorder 1, %s15
      %p162 = scmp.lt.s32.totalorder %s15, 9
      %p163 = pnand %p161, %p162
      %p164 = pneg %p163
      // Predicated region
      $region25: #{tpu_custom_call.1} parent=5 // pred_check
        _
      $region26: #{tpu_custom_call.1} parent=5 // pred_check_branch
        %166 = sbr.rel (%p163) target = $region28
      $region27: #{tpu_custom_call.1} parent=5 // pred_region
        %s167 = ssub.s32 %s15, 1
        %s168 = sand.u32 %s42, 1
        %s169 = scalar_lea.sflag [#allocation3], %s168
        %s170 = sand.u32 %s42, 1
        %s171 = smul.addr %s170, 16
        %s172 = scalar_lea.vmem [#allocation2], %s171
        // Predicated region
        $region29: #{tpu_custom_call.1} parent=27 // pred_check
          %p173 = pneg %p55
        $region30: #{tpu_custom_call.1} parent=27 // pred_check_branch
          %175 = sbr.rel (%p173) target = $region32
        $region31: #{tpu_custom_call.1} parent=27 // pred_region
          %177 = dma.done %s169, 256
        $region32: #{tpu_custom_call.1} parent=27 // pred_fallthru
          _
        // Predicated region
        $region33: #{tpu_custom_call.1} parent=27 // pred_check
          %p178 = pneg %p76
        $region34: #{tpu_custom_call.1} parent=27 // pred_check_branch
          %180 = sbr.rel (%p178) target = $region36
        $region35: #{tpu_custom_call.1} parent=27 // pred_region
          %182 = dma.done [#allocation6], 256
        $region36: #{tpu_custom_call.1} parent=27 // pred_fallthru
          _
        %s183 = sand.u32 %s42, 1
        %s184 = scalar_lea.sflag [#allocation3], %s183
        %s185 = sand.u32 %s42, 1
        %s186 = smul.addr %s185, 16
        %s187 = scalar_lea.vmem [#allocation2], %s186
        %p188 = pneg %p55
        %p189 = pneg %p52
        %p190 = pneg %p76
        %p191 = pneg %p73
        %p192 = pneg %p104
        %p193 = pneg %p101
        %s194 = sand.u32 %s91, 1
        %s195 = scalar_lea.sflag [#allocation4], %s194
        %s196 = sand.u32 %s91, 1
        %s197 = smul.addr %s196, 32
        %s198 = scalar_lea.vmem [#allocation7], %s197
        %v199 = vld [vmem:[#allocation5] sm:$0xff]
        %v200 = vld [vmem:[#allocation5 + $0x8] sm:$0xff]
        %v201 = vld [vmem:[%s172] sm:$0xff]
        %v202 = vld [vmem:[%s172 + $0x8] sm:$0xff]
        %vm205 = vcmask 1040384
        %v206 = vrot.slane %v201, 7
        %v207 = vrot.slane %v202, 7
        %v208 = vsel %vm205, %v206, %v207
        %v211 = vsel %vm205, %v201, %v206
        %vm212 = vcmask 1046528
        %v213 = vrot.slane %v201, 1
        %v214 = vrot.slane %v202, 1
        %v215 = vsel %vm212, %v213, %v214
        %v218 = vsel %vm212, %v214, %v202
        %v219 = vmul.f32 %v211, 0.25
        %v220 = vmul.f32 %v208, 0.25
        %v221 = vmul.f32 %v201, 0.75
        %v222 = vmul.f32 %v202, 0.75
        %v223 = vadd.f32 %v219, %v221
        %v224 = vadd.f32 %v220, %v222
        %v225 = vmul.f32 %v215, 0.25
        %v226 = vmul.f32 %v218, 0.25
        %v227 = vadd.f32 %v221, %v225
        %v228 = vadd.f32 %v222, %v226
        %v231 = vrot.slane %v223, 1
        %v232 = vrot.slane %v223, 2
        %v233 = vrot.slane %v223, 3
        %v234 = vrot.slane %v223, 4
        %v235 = vrot.slane %v223, 5
        %v236 = vrot.slane %v223, 6
        %v237 = vrot.slane %v223, 7
        %v238 = vrot.slane %v224, 1
        %v239 = vrot.slane %v224, 2
        %v240 = vrot.slane %v224, 3
        %v241 = vrot.slane %v224, 4
        %v242 = vrot.slane %v224, 5
        %v243 = vrot.slane %v224, 6
        %v244 = vrot.slane %v224, 7
        %v261 = vrot.slane %v227, 1
        %v262 = vrot.slane %v227, 2
        %v263 = vrot.slane %v227, 3
        %v264 = vrot.slane %v227, 4
        %v265 = vrot.slane %v227, 5
        %v266 = vrot.slane %v227, 6
        %v267 = vrot.slane %v227, 7
        %v268 = vrot.slane %v228, 1
        %v269 = vrot.slane %v228, 2
        %v270 = vrot.slane %v228, 3
        %v271 = vrot.slane %v228, 4
        %v272 = vrot.slane %v228, 5
        %v273 = vrot.slane %v228, 6
        %v274 = vrot.slane %v228, 7
        %v275 = vperm.slane %v227, 0
        %v276 = vperm.slane %v261, 0
        %v277 = vperm.slane %v262, 0
        %v278 = vperm.slane %v263, 0
        %v279 = vperm.slane %v264, 0
        %v280 = vperm.slane %v265, 0
        %v281 = vperm.slane %v266, 0
        %v282 = vperm.slane %v267, 0
        %v283 = vperm.slane %v228, 0
        %v284 = vperm.slane %v268, 0
        %v285 = vperm.slane %v269, 0
        %v286 = vperm.slane %v270, 0
        %v287 = vperm.slane %v271, 0
        %v288 = vperm.slane %v272, 0
        %v289 = vperm.slane %v273, 0
        %v290 = vperm.slane %v274, 0
        %v307 = vsel %vm205, %v223, %v275
        %v308 = vsel %vm205, %v231, %v276
        %v309 = vsel %vm205, %v232, %v277
        %v310 = vsel %vm205, %v233, %v278
        %v311 = vsel %vm205, %v234, %v279
        %v312 = vsel %vm205, %v235, %v280
        %v313 = vsel %vm205, %v236, %v281
        %v314 = vsel %vm205, %v237, %v282
        %v315 = vsel %vm205, %v224, %v283
        %v316 = vsel %vm205, %v238, %v284
        %v317 = vsel %vm205, %v239, %v285
        %v318 = vsel %vm205, %v240, %v286
        %v319 = vsel %vm205, %v241, %v287
        %v320 = vsel %vm205, %v242, %v288
        %v321 = vsel %vm205, %v243, %v289
        %v322 = vsel %vm205, %v244, %v290
        %339 = vst [vmem:[#allocation1] ss:$4 sm:$0xff] %v307
        %s340 = scalar_lea.vmem [#allocation1], 1
        %341 = vst [vmem:[%s340] ss:$4 sm:$0xff] %v308
        %s342 = scalar_lea.vmem [#allocation1], 2
        %343 = vst [vmem:[%s342] ss:$4 sm:$0xff] %v309
        %s344 = scalar_lea.vmem [#allocation1], 3
        %345 = vst [vmem:[%s344] ss:$4 sm:$0xff] %v310
        %s346 = scalar_lea.vmem [#allocation1], 32
        %347 = vst [vmem:[%s346] ss:$4 sm:$0xff] %v311
        %s348 = scalar_lea.vmem [#allocation1], 33
        %349 = vst [vmem:[%s348] ss:$4 sm:$0xff] %v312
        %s350 = scalar_lea.vmem [#allocation1], 34
        %351 = vst [vmem:[%s350] ss:$4 sm:$0xff] %v313
        %s352 = scalar_lea.vmem [#allocation1], 35
        %353 = vst [vmem:[%s352] ss:$4 sm:$0xff] %v314
        %v354 = vld.sshfl [vmem:[#allocation1] sm:$0xff pattern:$0x73625140]
        %v355 = vld.sshfl [vmem:[#allocation1 + $0x20] sm:$0xff pattern:$0x73625140]
        %356 = vst [vmem:[#allocation1] ss:$4 sm:$0xff] %v315
        %357 = vst [vmem:[%s340] ss:$4 sm:$0xff] %v316
        %358 = vst [vmem:[%s342] ss:$4 sm:$0xff] %v317
        %359 = vst [vmem:[%s344] ss:$4 sm:$0xff] %v318
        %360 = vst [vmem:[%s346] ss:$4 sm:$0xff] %v319
        %361 = vst [vmem:[%s348] ss:$4 sm:$0xff] %v320
        %362 = vst [vmem:[%s350] ss:$4 sm:$0xff] %v321
        %363 = vst [vmem:[%s352] ss:$4 sm:$0xff] %v322
        %v364 = vld.sshfl [vmem:[#allocation1] sm:$0xff pattern:$0x73625140]
        %v365 = vld.sshfl [vmem:[#allocation1 + $0x20] sm:$0xff pattern:$0x73625140]
        %vm366 = vcmask 130048
        %v367 = vsel %vm366, %v354, 0
        %v369 = vsel %vm366, %v355, 0
        %v371 = vsel %vm366, %v364, 0
        %v373 = vsel %vm366, %v365, 0
        %375 = vmatpush.msra.mxu0 0.0
        %376 = vmatpush.msra.mxu0 0.0
        %377 = vmatpush.msra.mxu0 0.0
        %378 = vmatpush.msra.mxu0 0.0
        %379 = vmatpush.msra.mxu0 0.0
        %380 = vmatpush.msra.mxu0 0.0
        %381 = vmatpush.msra.mxu0 0.0
        %382 = vmatpush.msra.mxu0 0.0
        %383 = vmatpush.msra.mxu0 0.0
        %384 = vmatpush.msra.mxu0 0.0
        %385 = vmatpush.msra.mxu0 0.0
        %386 = vmatpush.msra.mxu0 0.0
        %387 = vmatpush.msra.mxu0 0.0
        %388 = vmatpush.msra.mxu0 0.0
        %389 = vmatpush.msra.mxu0 %v200
        %390 = vmatpush.msra.mxu0 %v199
        %391 = vmatmul.f32.gmra.mxu0 %v367
        %v392 = vpop.f32.mrf.mxu0
        %v393 = vadd.f32 0.0, %v392
        %394 = vmatmul.f32.gmra.mxu0 %v369
        %v395 = vpop.f32.mrf.mxu0
        %v396 = vadd.f32 0.0, %v395
        %397 = vmatmul.f32.gmra.mxu0 %v371
        %v398 = vpop.f32.mrf.mxu0
        %v399 = vadd.f32 0.0, %v398
        %400 = vmatmul.f32.gmra.mxu0 %v373
        %v401 = vpop.f32.mrf.mxu0
        %v402 = vadd.f32 0.0, %v401
        %403 = vdwg.mxu0
        %vm404 = vcmask 261120
        %405 = vst.msk [vmem:[%s198] sm:$0xff] %vm404, %v393
        %406 = vst.msk [vmem:[%s198 + $0x8] sm:$0xff] %vm404, %v396
        %407 = vst.msk [vmem:[%s198 + $0x10] sm:$0xff] %vm404, %v399
        %408 = vst.msk [vmem:[%s198 + $0x18] sm:$0xff] %vm404, %v402
        %s409 = sand.u32 %s91, 1
        %s410 = scalar_lea.sflag [#allocation4], %s409
        %s411 = sand.u32 %s91, 1
        %s412 = smul.addr %s411, 32
        %s413 = scalar_lea.vmem [#allocation7], %s412
        // Predicated region
        $region37: #{tpu_custom_call.1} parent=27 // pred_check
          %p414 = pneg %p101
        $region38: #{tpu_custom_call.1} parent=27 // pred_check_branch
          %416 = sbr.rel (%p414) target = $region40
        $region39: #{tpu_custom_call.1} parent=27 // pred_region
          %418 = vsyncadd %s410, 0
          %s419 = smul.addr %s25, 4
          %s420 = smul.addr %s24, 16
          %s421 = sadd.s32 %s419, %s420
          %s422 = smul.addr %s421, 8
          %s423 = scalar_lea.hbm %s2, %s422
          %s424 = sshll.u32 %s413, 4
          %s425 = int_to_ptr.vmem [resolvable:$true] %s424
          %s426 = sshll.u32 %s423, 4
          %s427 = int_to_ptr.hbm [resolvable:$true] %s426
          %432 = dma.vmem_to_hbm [thread:$0]  %s425, 512, %s427, %s410, 128, 128, 8
        $region40: #{tpu_custom_call.1} parent=27 // pred_fallthru
          _
      $region28: #{tpu_custom_call.1} parent=5 // pred_fallthru
        _
      %p433 = scmp.le.s32.totalorder 2, %s15
      // Predicated region
      $region41: #{tpu_custom_call.1} parent=5 // pred_check
        %p434 = pneg %p433
      $region42: #{tpu_custom_call.1} parent=5 // pred_check_branch
        %436 = sbr.rel (%p434) target = $region44
      $region43: #{tpu_custom_call.1} parent=5 // pred_region
        %s437 = ssub.s32 %s15, 2
        // Predicated region
        $region45: #{tpu_custom_call.1} parent=43 // pred_check
          %p438 = pneg %p107
        $region46: #{tpu_custom_call.1} parent=43 // pred_check_branch
          %440 = sbr.rel (%p438) target = $region48
        $region47: #{tpu_custom_call.1} parent=43 // pred_region
          %s441 = sand.u32 %s92, 1
          %s442 = scalar_lea.sflag [#allocation4], %s441
          %s443 = sand.u32 %s92, 1
          %s444 = smul.addr %s443, 32
          %s445 = scalar_lea.vmem [#allocation7], %s444
          %447 = dma.done %s442, 512
        $region48: #{tpu_custom_call.1} parent=43 // pred_fallthru
          _
      $region44: #{tpu_custom_call.1} parent=5 // pred_fallthru
        _
    $region6: #{tpu_custom_call.1} parent=1 // loop_footer
      %s19 = sadd.s32 1, %s15
    $region7: #{tpu_custom_call.1} parent=1 // loop_footer_branch
      %14 = sbr.rel target = $region3
    $region8: #{tpu_custom_call.1} parent=1 // loop_exit
      _
    %448 = vsyncpa [#allocation3], 1
    %s449 = scalar_lea.sflag [#allocation3], 1
    %450 = vsyncpa %s449, 1
    %451 = vsyncpa [#allocation6], 1
    %452 = vsyncpa [#allocation4], 1
    %s453 = scalar_lea.sflag [#allocation4], 1
    %454 = vsyncpa %s453, 1

</llo_original>
